<compile_context>
chip_gen: v7x
topology: tpu7x:2x2x1
jax: 0.10.0
libtpu: 0.0.40
codegen_flags: <defaults>
</compile_context>

<pallas_src>
import functools

import jax
import jax.numpy as jnp
from jax import lax
from jax.experimental import pallas as pl
from jax.experimental.pallas import tpu as pltpu


def _mlp_kernel(n_layers, *refs):
    """Fused MLP forward on one batch tile, computed transposed (batch on lanes).

    refs = (x_ref, w1_t, b1, w2_t, b2, ..., w_last_col, b_last, o_ref)
      x_ref      : (TM, OBS)      batch tile (batch on sublanes, features on lanes)
      w{l}_t     : (out_l, in_l)  hidden-layer weight (PyTorch layout), l < n_layers-1
      b{l}       : (out_l, 1)
      w_last_col : (H, 1)         final layer weight
      b_last     : (1, 1)
      o_ref      : (1, TM)        lane-dense output row
    """
    x_ref = refs[0]
    o_ref = refs[-1]
    params = refs[1:-1]

    # ---- First layer on the MXU without an explicit transpose ----
    # (H, OBS) contracted with (TM, OBS) on the OBS axis -> (H, TM), batch on lanes.
    x = x_ref[...].astype(jnp.float32)
    w0 = params[0][...]
    b0 = params[1][...]                       # (H, 1) -> broadcast along lanes
    h = lax.dot_general(
        w0, x,
        dimension_numbers=(((1,), (1,)), ((), ())),
        preferred_element_type=jnp.float32,
    ) + b0
    h = jnp.maximum(h, 0.0)

    # ---- Remaining hidden layers: plain MXU dots, lane-dense (H, TM) activations ----
    for layer in range(1, n_layers - 1):
        w = params[2 * layer][...]            # (H_out, H_in)
        b = params[2 * layer + 1][...]        # (H_out, 1)
        h = jnp.dot(w, h, preferred_element_type=jnp.float32) + b
        h = jnp.maximum(h, 0.0)

    # ---- Final Linear(H, 1): VPU broadcast-multiply + XLU sublane reduce ----
    # (keeps the degenerate 1-wide matmul off the MXU; result stays lane-dense)
    w_last = params[2 * (n_layers - 1)][...]      # (H, 1)
    b_last = params[2 * (n_layers - 1) + 1][...]  # (1, 1)
    r = jnp.sum(h * w_last, axis=0, keepdims=True) + b_last   # (1, TM)
    o_ref[...] = r.astype(o_ref.dtype)


def neural_reward_forward(obs, weights, biases, *, max_tm=4096):
    """obs: (B, obs_size) f32; weights[i]: (in_i, out_i); biases[i]: (1, out_i).

    Returns (B, 1) f32, matching NeuralReward.forward.
    """
    B, obs_size = obs.shape
    n_layers = len(weights)
    assert n_layers >= 2, "expects at least one hidden layer (n_hidden_layers >= 1)"
    assert max_tm % 128 == 0, "max_tm must be a multiple of 128"

    # Kernel-side parameter layout:
    #   hidden layers: W^T (out, in) and b as an (out, 1) column (broadcast along lanes)
    #   final layer:   weight as (H, 1) column, bias as (1, 1)
    flat_params = []
    for l, (w, b) in enumerate(zip(weights, biases)):
        if l < n_layers - 1:
            flat_params.append(w.T)                 # (out, in)
            flat_params.append(b.reshape(-1, 1))    # (out, 1)
        else:
            flat_params.append(w)                   # (H, 1)
            flat_params.append(b.reshape(1, 1))     # (1, 1)

    # Batch tiling (no host-side padding):
    #  - small B: one tile equal to the full array (block == full dims, no (8,128) issue)
    #  - larger B: lane-dense 128-multiple tiles, at least 2 of them so v7x can shard the
    #    "parallel" batch axis across both TensorCores; a ragged last tile is fine because
    #    Pallas masks the partial output store and the garbage tail columns are never kept.
    if B <= 256:
        tm_eff = B
    else:
        tm_eff = min(max_tm, ((pl.cdiv(B, 2) + 127) // 128) * 128)
    num_tiles = pl.cdiv(B, tm_eff)

    in_specs = [pl.BlockSpec((tm_eff, obs_size), lambda i: (i, 0))]
    for p in flat_params:
        # Constant block index -> parameters stay resident in VMEM across the grid.
        in_specs.append(pl.BlockSpec(p.shape, lambda i: (0, 0)))

    out_spec = pl.BlockSpec((1, tm_eff), lambda i: (0, i))   # lane-dense (1, TM) tiles

    kernel = functools.partial(_mlp_kernel, n_layers)

    flops = 2 * B * int(sum(int(w.size) for w in weights))
    bytes_accessed = int(
        obs.size * 4 + sum(int(p.size) * 4 for p in flat_params) + B * 4
    )

    out_row = pl.pallas_call(
        kernel,
        out_shape=jax.ShapeDtypeStruct((1, B), jnp.float32),
        grid=(num_tiles,),
        in_specs=in_specs,
        out_specs=out_spec,
        compiler_params=pltpu.CompilerParams(
            dimension_semantics=("parallel",),      # v7x: shard batch tiles across both TCs
            vmem_limit_bytes=32 * 1024 * 1024,      # headroom for larger tiles, incl. v5e
        ),
        cost_estimate=pl.CostEstimate(
            flops=flops, transcendentals=0, bytes_accessed=bytes_accessed
        ),
    )(obs.astype(jnp.float32), *flat_params)

    return out_row.reshape(B, 1)


def make_mlp_params(key, obs_size, out_dim, hidden_dim, n_hidden_layers):
    """Deterministic synthetic params matching make_mlp_layers' Linear shapes ((in, out))."""
    dims = [obs_size] + [hidden_dim] * n_hidden_layers + [out_dim]
    weights, biases = [], []
    for i in range(len(dims) - 1):
        key, kw, kb = jax.random.split(key, 3)
        fan_in = dims[i]
        bound = 1.0 / jnp.sqrt(fan_in)
        weights.append(
            jax.random.uniform(kw, (dims[i], dims[i + 1]), jnp.float32, -bound, bound)
        )
        biases.append(
            jax.random.uniform(kb, (1, dims[i + 1]), jnp.float32, -bound, bound)
        )
    return weights, biases


def neural_reward_reference(obs, weights, biases):
    h = obs
    for i, (w, b) in enumerate(zip(weights, biases)):
        h = h @ w + b
        if i < len(weights) - 1:
            h = jnp.maximum(h, 0.0)
    return h


if __name__ == "__main__":
    # Shapes consistent with the module: obs_shape=(32,), cost_take_dim=-1,
    # reward_hidden_dim=32, n_hidden_layers=2.
    B, OBS, HID, NHID = 1024, 32, 32, 2

    key = jax.random.PRNGKey(0)
    key, k_obs = jax.random.split(key)
    obs = jax.random.normal(k_obs, (B, OBS), jnp.float32)

    weights, biases = make_mlp_params(key, OBS, 1, HID, NHID)

    # Multi-tile path (two 512-row tiles -> both TCs on v7x).
    out = jax.block_until_ready(neural_reward_forward(obs, weights, biases))
    ref = neural_reward_reference(obs, weights, biases)
    assert out.shape == (B, 1)
    assert jnp.allclose(out, ref, atol=1e-4, rtol=1e-4), "mismatch vs JAX reference (B=1024)"

    # Small-batch single-tile path (original B=8 use case).
    obs_small = obs[:8]
    out_small = jax.block_until_ready(neural_reward_forward(obs_small, weights, biases))
    ref_small = neural_reward_reference(obs_small, weights, biases)
    assert out_small.shape == (8, 1)
    assert jnp.allclose(out_small, ref_small, atol=1e-4, rtol=1e-4), "mismatch (B=8)"

    # Ragged-batch path (no host-side pad; partial last tile is masked by Pallas).
    obs_rag = obs[:700]
    out_rag = jax.block_until_ready(neural_reward_forward(obs_rag, weights, biases))
    ref_rag = neural_reward_reference(obs_rag, weights, biases)
    assert out_rag.shape == (700, 1)
    assert jnp.allclose(out_rag, ref_rag, atol=1e-4, rtol=1e-4), "mismatch (B=700, ragged)"

    print("KERNEL_OK")
</pallas_src>

<mosaic_0001>
module attributes {stable_mosaic.version = 11 : i64} {
  func.func @_mlp_kernel(%arg0: i32, %arg1: memref<512x32xf32, #tpu.memory_space<vmem>>, %arg2: memref<32x32xf32, #tpu.memory_space<vmem>>, %arg3: memref<32x1xf32, #tpu.memory_space<vmem>>, %arg4: memref<32x32xf32, #tpu.memory_space<vmem>>, %arg5: memref<32x1xf32, #tpu.memory_space<vmem>>, %arg6: memref<32x1xf32, #tpu.memory_space<vmem>>, %arg7: memref<1x1xf32, #tpu.memory_space<vmem>>, %arg8: memref<1x512xf32, #tpu.memory_space<vmem>>) attributes {dimension_semantics = [#tpu.dimension_semantics<parallel>], iteration_bounds = array<i64: 2>, scalar_prefetch = 0 : i64, scratch_operands = 0 : i64, tpu.core_type = #tpu.core_type<tc>, window_params = [{transform_indices = @transform_0, window_bounds = array<i64: 512, 32>}, {pipeline_mode = #tpu.pipeline_mode<synchronous>, transform_indices = @transform_1, window_bounds = array<i64: 32, 32>}, {pipeline_mode = #tpu.pipeline_mode<synchronous>, transform_indices = @transform_2, window_bounds = array<i64: 32, 1>}, {pipeline_mode = #tpu.pipeline_mode<synchronous>, transform_indices = @transform_3, window_bounds = array<i64: 32, 32>}, {pipeline_mode = #tpu.pipeline_mode<synchronous>, transform_indices = @transform_4, window_bounds = array<i64: 32, 1>}, {pipeline_mode = #tpu.pipeline_mode<synchronous>, transform_indices = @transform_5, window_bounds = array<i64: 32, 1>}, {pipeline_mode = #tpu.pipeline_mode<synchronous>, transform_indices = @transform_6, window_bounds = array<i64: 1, 1>}, {transform_indices = @transform_7, window_bounds = array<i64: 1, 512>}]} {
    %c0 = arith.constant 0 : index
    %c0_0 = arith.constant 0 : index
    %0 = vector.load %arg1[%c0, %c0_0] : memref<512x32xf32, #tpu.memory_space<vmem>>, vector<512x32xf32>
    %c0_1 = arith.constant 0 : index
    %c0_2 = arith.constant 0 : index
    %1 = vector.load %arg2[%c0_1, %c0_2] : memref<32x32xf32, #tpu.memory_space<vmem>>, vector<32x32xf32>
    %c0_3 = arith.constant 0 : index
    %c0_4 = arith.constant 0 : index
    %2 = vector.load %arg3[%c0_3, %c0_4] : memref<32x1xf32, #tpu.memory_space<vmem>>, vector<32x1xf32>
    %cst = arith.constant dense<0.000000e+00> : vector<32x512xf32>
    %3 = tpu.matmul %1, %0, %cst {dimension_numbers = #tpu.dot_dimension_numbers<[1], [1], [0], [0], [0, 0, 1, 0], [], []>} : vector<32x32xf32>, vector<512x32xf32>, vector<32x512xf32> -> vector<32x512xf32>
    %4 = vector.broadcast %2 : vector<32x1xf32> to vector<32x512xf32>
    %5 = arith.addf %3, %4 : vector<32x512xf32>
    %cst_5 = arith.constant 0.000000e+00 : f32
    %6 = vector.broadcast %cst_5 : f32 to vector<32x512xf32>
    %7 = arith.maximumf %5, %6 : vector<32x512xf32>
    %c0_6 = arith.constant 0 : index
    %c0_7 = arith.constant 0 : index
    %8 = vector.load %arg4[%c0_6, %c0_7] : memref<32x32xf32, #tpu.memory_space<vmem>>, vector<32x32xf32>
    %c0_8 = arith.constant 0 : index
    %c0_9 = arith.constant 0 : index
    %9 = vector.load %arg5[%c0_8, %c0_9] : memref<32x1xf32, #tpu.memory_space<vmem>>, vector<32x1xf32>
    %cst_10 = arith.constant dense<0.000000e+00> : vector<32x512xf32>
    %10 = tpu.matmul %8, %7, %cst_10 {dimension_numbers = #tpu.dot_dimension_numbers<[1], [0], [0], [1], [0, 0, 1, 1], [], []>} : vector<32x32xf32>, vector<32x512xf32>, vector<32x512xf32> -> vector<32x512xf32>
    %11 = vector.broadcast %9 : vector<32x1xf32> to vector<32x512xf32>
    %12 = arith.addf %10, %11 : vector<32x512xf32>
    %cst_11 = arith.constant 0.000000e+00 : f32
    %13 = vector.broadcast %cst_11 : f32 to vector<32x512xf32>
    %14 = arith.maximumf %12, %13 : vector<32x512xf32>
    %c0_12 = arith.constant 0 : index
    %c0_13 = arith.constant 0 : index
    %15 = vector.load %arg6[%c0_12, %c0_13] : memref<32x1xf32, #tpu.memory_space<vmem>>, vector<32x1xf32>
    %c0_14 = arith.constant 0 : index
    %c0_15 = arith.constant 0 : index
    %16 = vector.load %arg7[%c0_14, %c0_15] : memref<1x1xf32, #tpu.memory_space<vmem>>, vector<1x1xf32>
    %17 = vector.broadcast %15 : vector<32x1xf32> to vector<32x512xf32>
    %18 = arith.mulf %14, %17 : vector<32x512xf32>
    %cst_16 = arith.constant dense<0.000000e+00> : vector<512xf32>
    %19 = vector.multi_reduction <add>, %18, %cst_16 [0] : vector<32x512xf32> to vector<512xf32>
    %20 = vector.shape_cast %19 : vector<512xf32> to vector<1x512xf32>
    %21 = vector.broadcast %16 : vector<1x1xf32> to vector<1x512xf32>
    %22 = arith.addf %20, %21 : vector<1x512xf32>
    %c0_17 = arith.constant 0 : index
    %c0_18 = arith.constant 0 : index
    %23 = vector.load %arg8[%c0_17, %c0_18] : memref<1x512xf32, #tpu.memory_space<vmem>>, vector<1x512xf32>
    tpu.vector_store %arg8[%c0_17, %c0_18], %22 {strides = array<i32>} : memref<1x512xf32, #tpu.memory_space<vmem>>, vector<1x512xf32>,
    return
  }
  func.func @transform_0(%arg0: i32) -> (i32, i32) {
    %c0_i32 = arith.constant 0 : i32
    %c0_i32_0 = arith.constant 0 : i32
    return %arg0, %c0_i32 : i32, i32
  }
  func.func @transform_1(%arg0: i32) -> (i32, i32) {
    %c0_i32 = arith.constant 0 : i32
    %c0_i32_0 = arith.constant 0 : i32
    %c0_i32_1 = arith.constant 0 : i32
    return %c0_i32, %c0_i32_0 : i32, i32
  }
  func.func @transform_2(%arg0: i32) -> (i32, i32) {
    %c0_i32 = arith.constant 0 : i32
    %c0_i32_0 = arith.constant 0 : i32
    %c0_i32_1 = arith.constant 0 : i32
    return %c0_i32, %c0_i32_0 : i32, i32
  }
  func.func @transform_3(%arg0: i32) -> (i32, i32) {
    %c0_i32 = arith.constant 0 : i32
    %c0_i32_0 = arith.constant 0 : i32
    %c0_i32_1 = arith.constant 0 : i32
    return %c0_i32, %c0_i32_0 : i32, i32
  }
  func.func @transform_4(%arg0: i32) -> (i32, i32) {
    %c0_i32 = arith.constant 0 : i32
    %c0_i32_0 = arith.constant 0 : i32
    %c0_i32_1 = arith.constant 0 : i32
    return %c0_i32, %c0_i32_0 : i32, i32
  }
  func.func @transform_5(%arg0: i32) -> (i32, i32) {
    %c0_i32 = arith.constant 0 : i32
    %c0_i32_0 = arith.constant 0 : i32
    %c0_i32_1 = arith.constant 0 : i32
    return %c0_i32, %c0_i32_0 : i32, i32
  }
  func.func @transform_6(%arg0: i32) -> (i32, i32) {
    %c0_i32 = arith.constant 0 : i32
    %c0_i32_0 = arith.constant 0 : i32
    %c0_i32_1 = arith.constant 0 : i32
    return %c0_i32, %c0_i32_0 : i32, i32
  }
  func.func @transform_7(%arg0: i32) -> (i32, i32) {
    %c0_i32 = arith.constant 0 : i32
    %c0_i32_0 = arith.constant 0 : i32
    return %c0_i32, %arg0 : i32, i32
  }
}

</mosaic_0001>

<llo_original>
// kernel: tpu_custom_call.1
$region0: #{tpu_custom_call.1}
  #allocation0 [shape = 'u32[]', space=smem, size = 0x4, offset = 0x4, fixed_abs, tag = 'smem constant byte address 0x4 - core index']
  #allocation1 [shape = 'u32[144,128]{1,0:T(1,128)}', space=vmem, size = 0x12000, scoped, tag = 'internal scratch']
  #allocation2 [shape = 'f32[1,1]{1,0:T(1,128)S(1)}', space=vmem, size = 0x200, scoped, tag = 'scoped memory for tpu_custom_call.1']
  %s0 = inlined_call_operand.vmem [shape: f32[1024,32], index: 0, kind: input, shape index: {}]
  %s1 = inlined_call_operand.vmem [shape: f32[32,32], index: 1, kind: input, shape index: {}]
  %s2 = inlined_call_operand.vmem [shape: f32[32,1], index: 2, kind: input, shape index: {}]
  %s3 = inlined_call_operand.vmem [shape: f32[32,32], index: 3, kind: input, shape index: {}]
  %s4 = inlined_call_operand.vmem [shape: f32[32,1], index: 4, kind: input, shape index: {}]
  %s5 = inlined_call_operand.vmem [shape: f32[32,1], index: 5, kind: input, shape index: {}]
  %s6 = inlined_call_operand.<no memory space> [shape: f32[1,1], index: 6, kind: input, shape index: {}]
  %s7 = inlined_call_operand.hbm [shape: f32[1,1024], index: 7, kind: output, shape index: {}]
  %s8 = sld [smem:[#allocation0]]
  $region61: #{tpu_custom_call.1} parent=0
    _
  %s10 = ssub.s32 1, %s8
  %s11 = scalar_select 0, %s10, %s8
  %v12 = vstv %s6
  %13 = vst [vmem:[#allocation2] sm:$0x1] %v12
  $region1: #{tpu_custom_call.1} parent=0
    #allocation3 [shape = 'u8[4096]{0}', space=vmem, size = 0x1000, scoped, tag = 'output window, operand 0']
    #allocation4 [shape = 's32[2]{0}', space=sflag, size = 0x8, scoped, tag = 'scoped memory for tpu_custom_call.1']
    %14 = vsyncpa [#allocation4], 0
    %s15 = scalar_lea.sflag [#allocation4], 1
    %16 = vsyncpa %s15, 0
    loop: start=0, step=1, limit=4
    $region2: #{tpu_custom_call.1} parent=1 // loop_pre_header
      _
    $region3: #{tpu_custom_call.1} parent=1 // loop_header
      %s18 = sphi 0, %s22
      %p19 = scmp.ge.s32.totalorder %s18, 4
      %s28 = sphi 0, %s30
      %s31 = sphi 0, %s28
      %s32 = sphi 0, %s31
      %s48 = sphi 0, %s32
      %s52 = sphi 0, %s52
      %s54 = sphi 0, %s52
      %s55 = sphi 0, %s54
      %s69 = sphi 0, %s55
      %s73 = sphi 0, %s73
      %s75 = sphi 0, %s73
      %s76 = sphi 0, %s75
      %s90 = sphi 0, %s76
      %s94 = sphi 0, %s94
      %s96 = sphi 0, %s94
      %s97 = sphi 0, %s96
      %s111 = sphi 0, %s97
      %s115 = sphi 0, %s115
      %s117 = sphi 0, %s115
      %s118 = sphi 0, %s117
      %s132 = sphi 0, %s118
      %s136 = sphi 0, %s136
      %s138 = sphi 0, %s136
      %s139 = sphi 0, %s138
      %s153 = sphi 0, %s139
      %s157 = sphi 0, %s157
      %s159 = sphi 0, %s157
      %s160 = sphi 0, %s159
      %s174 = sphi 0, %s160
      %s180 = sphi 0, %s182
      %s183 = sphi 0, %s180
      %s184 = sphi 0, %s183
      %s200 = sphi 0, %s184
    $region4: #{tpu_custom_call.1} parent=1 // loop_header_branch
      %21 = sbr.rel (%p19) target = $region8
    $region5: #{tpu_custom_call.1} parent=1 // loop_body
      %s23 = ssub.s32 %s18, 1
      %s24 = ssub.s32 %s18, 2
      %s25 = sadd.s32 %s18, 1
      %s26 = ssub.s32 %s18, %s25
      %p27 = scmp.eq.s32.totalorder %s26, 0
      %s29 = sadd.s32 %s28, 1
      %s30 = scalar_select %p27, %s28, %s29
      %p33 = pneg %p27
      %p34 = scmp.eq.s32.totalorder %s18, 1
      %p35 = por %p33, %p34
      %p36 = scmp.ne.s32.totalorder %s28, %s31
      %p37 = scmp.eq.s32.totalorder %s18, 0
      %p38 = por %p36, %p37
      %p39 = scmp.ne.s32.totalorder %s28, %s31
      %p40 = scmp.eq.s32.totalorder %s23, 1
      %p41 = por %p39, %p40
      %p42 = scmp.ne.s32.totalorder %s31, %s32
      %p43 = scmp.eq.s32.totalorder %s23, 0
      %p44 = por %p42, %p43
      %p45 = scmp.ne.s32.totalorder %s31, %s32
      %p46 = scmp.eq.s32.totalorder %s24, 1
      %p47 = por %p45, %p46
      %p49 = scmp.ne.s32.totalorder %s32, %s48
      %p50 = scmp.eq.s32.totalorder %s24, 0
      %p51 = por %p49, %p50
      %s53 = sadd.s32 %s52, 1
      %p56 = scmp.eq.s32.totalorder %s18, 1
      %p57 = scmp.ne.s32.totalorder %s52, %s54
      %p58 = scmp.eq.s32.totalorder %s18, 0
      %p59 = por %p57, %p58
      %p60 = scmp.ne.s32.totalorder %s52, %s54
      %p61 = scmp.eq.s32.totalorder %s23, 1
      %p62 = por %p60, %p61
      %p63 = scmp.ne.s32.totalorder %s54, %s55
      %p64 = scmp.eq.s32.totalorder %s23, 0
      %p65 = por %p63, %p64
      %p66 = scmp.ne.s32.totalorder %s54, %s55
      %p67 = scmp.eq.s32.totalorder %s24, 1
      %p68 = por %p66, %p67
      %p70 = scmp.ne.s32.totalorder %s55, %s69
      %p71 = scmp.eq.s32.totalorder %s24, 0
      %p72 = por %p70, %p71
      %s74 = sadd.s32 %s73, 1
      %p77 = scmp.eq.s32.totalorder %s18, 1
      %p78 = scmp.ne.s32.totalorder %s73, %s75
      %p79 = scmp.eq.s32.totalorder %s18, 0
      %p80 = por %p78, %p79
      %p81 = scmp.ne.s32.totalorder %s73, %s75
      %p82 = scmp.eq.s32.totalorder %s23, 1
      %p83 = por %p81, %p82
      %p84 = scmp.ne.s32.totalorder %s75, %s76
      %p85 = scmp.eq.s32.totalorder %s23, 0
      %p86 = por %p84, %p85
      %p87 = scmp.ne.s32.totalorder %s75, %s76
      %p88 = scmp.eq.s32.totalorder %s24, 1
      %p89 = por %p87, %p88
      %p91 = scmp.ne.s32.totalorder %s76, %s90
      %p92 = scmp.eq.s32.totalorder %s24, 0
      %p93 = por %p91, %p92
      %s95 = sadd.s32 %s94, 1
      %p98 = scmp.eq.s32.totalorder %s18, 1
      %p99 = scmp.ne.s32.totalorder %s94, %s96
      %p100 = scmp.eq.s32.totalorder %s18, 0
      %p101 = por %p99, %p100
      %p102 = scmp.ne.s32.totalorder %s94, %s96
      %p103 = scmp.eq.s32.totalorder %s23, 1
      %p104 = por %p102, %p103
      %p105 = scmp.ne.s32.totalorder %s96, %s97
      %p106 = scmp.eq.s32.totalorder %s23, 0
      %p107 = por %p105, %p106
      %p108 = scmp.ne.s32.totalorder %s96, %s97
      %p109 = scmp.eq.s32.totalorder %s24, 1
      %p110 = por %p108, %p109
      %p112 = scmp.ne.s32.totalorder %s97, %s111
      %p113 = scmp.eq.s32.totalorder %s24, 0
      %p114 = por %p112, %p113
      %s116 = sadd.s32 %s115, 1
      %p119 = scmp.eq.s32.totalorder %s18, 1
      %p120 = scmp.ne.s32.totalorder %s115, %s117
      %p121 = scmp.eq.s32.totalorder %s18, 0
      %p122 = por %p120, %p121
      %p123 = scmp.ne.s32.totalorder %s115, %s117
      %p124 = scmp.eq.s32.totalorder %s23, 1
      %p125 = por %p123, %p124
      %p126 = scmp.ne.s32.totalorder %s117, %s118
      %p127 = scmp.eq.s32.totalorder %s23, 0
      %p128 = por %p126, %p127
      %p129 = scmp.ne.s32.totalorder %s117, %s118
      %p130 = scmp.eq.s32.totalorder %s24, 1
      %p131 = por %p129, %p130
      %p133 = scmp.ne.s32.totalorder %s118, %s132
      %p134 = scmp.eq.s32.totalorder %s24, 0
      %p135 = por %p133, %p134
      %s137 = sadd.s32 %s136, 1
      %p140 = scmp.eq.s32.totalorder %s18, 1
      %p141 = scmp.ne.s32.totalorder %s136, %s138
      %p142 = scmp.eq.s32.totalorder %s18, 0
      %p143 = por %p141, %p142
      %p144 = scmp.ne.s32.totalorder %s136, %s138
      %p145 = scmp.eq.s32.totalorder %s23, 1
      %p146 = por %p144, %p145
      %p147 = scmp.ne.s32.totalorder %s138, %s139
      %p148 = scmp.eq.s32.totalorder %s23, 0
      %p149 = por %p147, %p148
      %p150 = scmp.ne.s32.totalorder %s138, %s139
      %p151 = scmp.eq.s32.totalorder %s24, 1
      %p152 = por %p150, %p151
      %p154 = scmp.ne.s32.totalorder %s139, %s153
      %p155 = scmp.eq.s32.totalorder %s24, 0
      %p156 = por %p154, %p155
      %s158 = sadd.s32 %s157, 1
      %p161 = scmp.eq.s32.totalorder %s18, 1
      %p162 = scmp.ne.s32.totalorder %s157, %s159
      %p163 = scmp.eq.s32.totalorder %s18, 0
      %p164 = por %p162, %p163
      %p165 = scmp.ne.s32.totalorder %s157, %s159
      %p166 = scmp.eq.s32.totalorder %s23, 1
      %p167 = por %p165, %p166
      %p168 = scmp.ne.s32.totalorder %s159, %s160
      %p169 = scmp.eq.s32.totalorder %s23, 0
      %p170 = por %p168, %p169
      %p171 = scmp.ne.s32.totalorder %s159, %s160
      %p172 = scmp.eq.s32.totalorder %s24, 1
      %p173 = por %p171, %p172
      %p175 = scmp.ne.s32.totalorder %s160, %s174
      %p176 = scmp.eq.s32.totalorder %s24, 0
      %p177 = por %p175, %p176
      %s178 = ssub.s32 %s18, %s25
      %p179 = scmp.eq.s32.totalorder %s178, 0
      %s181 = sadd.s32 %s180, 1
      %s182 = scalar_select %p179, %s180, %s181
      %p185 = pneg %p179
      %p186 = scmp.eq.s32.totalorder %s18, 1
      %p187 = por %p185, %p186
      %p188 = scmp.ne.s32.totalorder %s180, %s183
      %p189 = scmp.eq.s32.totalorder %s18, 0
      %p190 = por %p188, %p189
      %p191 = scmp.ne.s32.totalorder %s180, %s183
      %p192 = scmp.eq.s32.totalorder %s23, 1
      %p193 = por %p191, %p192
      %p194 = scmp.ne.s32.totalorder %s183, %s184
      %p195 = scmp.eq.s32.totalorder %s23, 0
      %p196 = por %p194, %p195
      %p197 = scmp.ne.s32.totalorder %s183, %s184
      %p198 = scmp.eq.s32.totalorder %s24, 1
      %p199 = por %p197, %p198
      %p201 = scmp.ne.s32.totalorder %s184, %s200
      %p202 = scmp.eq.s32.totalorder %s24, 0
      %p203 = por %p201, %p202
      %p204 = scmp.le.s32.totalorder 1, %s18
      %p205 = scmp.lt.s32.totalorder %s18, 3
      %p206 = pnand %p204, %p205
      %p207 = pneg %p206
      // Predicated region
      $region9: #{tpu_custom_call.1} parent=5 // pred_check
        _
      $region10: #{tpu_custom_call.1} parent=5 // pred_check_branch
        %209 = sbr.rel (%p206) target = $region12
      $region11: #{tpu_custom_call.1} parent=5 // pred_region
        %s210 = ssub.s32 %s18, 1
        // Predicated region
        $region13: #{tpu_custom_call.1} parent=11 // pred_check
          %p211 = pneg %p65
        $region14: #{tpu_custom_call.1} parent=11 // pred_check_branch
          %213 = sbr.rel (%p211) target = $region16
        $region15: #{tpu_custom_call.1} parent=11 // pred_region
          _
        $region16: #{tpu_custom_call.1} parent=11 // pred_fallthru
          _
        // Predicated region
        $region17: #{tpu_custom_call.1} parent=11 // pred_check
          %p214 = pneg %p86
        $region18: #{tpu_custom_call.1} parent=11 // pred_check_branch
          %216 = sbr.rel (%p214) target = $region20
        $region19: #{tpu_custom_call.1} parent=11 // pred_region
          _
        $region20: #{tpu_custom_call.1} parent=11 // pred_fallthru
          _
        // Predicated region
        $region21: #{tpu_custom_call.1} parent=11 // pred_check
          %p217 = pneg %p107
        $region22: #{tpu_custom_call.1} parent=11 // pred_check_branch
          %219 = sbr.rel (%p217) target = $region24
        $region23: #{tpu_custom_call.1} parent=11 // pred_region
          _
        $region24: #{tpu_custom_call.1} parent=11 // pred_fallthru
          _
        // Predicated region
        $region25: #{tpu_custom_call.1} parent=11 // pred_check
          %p220 = pneg %p128
        $region26: #{tpu_custom_call.1} parent=11 // pred_check_branch
          %222 = sbr.rel (%p220) target = $region28
        $region27: #{tpu_custom_call.1} parent=11 // pred_region
          _
        $region28: #{tpu_custom_call.1} parent=11 // pred_fallthru
          _
        // Predicated region
        $region29: #{tpu_custom_call.1} parent=11 // pred_check
          %p223 = pneg %p149
        $region30: #{tpu_custom_call.1} parent=11 // pred_check_branch
          %225 = sbr.rel (%p223) target = $region32
        $region31: #{tpu_custom_call.1} parent=11 // pred_region
          _
        $region32: #{tpu_custom_call.1} parent=11 // pred_fallthru
          _
        // Predicated region
        $region33: #{tpu_custom_call.1} parent=11 // pred_check
          %p226 = pneg %p170
        $region34: #{tpu_custom_call.1} parent=11 // pred_check_branch
          %228 = sbr.rel (%p226) target = $region36
        $region35: #{tpu_custom_call.1} parent=11 // pred_region
          _
        $region36: #{tpu_custom_call.1} parent=11 // pred_fallthru
          _
      $region12: #{tpu_custom_call.1} parent=5 // pred_fallthru
        _
      %p229 = scmp.lt.s32.totalorder %s18, 2
      // Predicated region
      $region37: #{tpu_custom_call.1} parent=5 // pred_check
        %p230 = pneg %p229
      $region38: #{tpu_custom_call.1} parent=5 // pred_check_branch
        %232 = sbr.rel (%p230) target = $region40
      $region39: #{tpu_custom_call.1} parent=5 // pred_region
        // Predicated region
        $region41: #{tpu_custom_call.1} parent=39 // pred_check
          %p233 = pneg %p38
        $region42: #{tpu_custom_call.1} parent=39 // pred_check_branch
          %235 = sbr.rel (%p233) target = $region44
        $region43: #{tpu_custom_call.1} parent=39 // pred_region
          %s236 = smul.u32 64, %s18
          %p237 = scmp.lt.s32.totalorder %s236, 127
          %s238 = scalar_select %p237, %s236, 127
          %s239 = smul.addr %s238, 8
          %s240 = scalar_lea.vmem %s0, %s239
          %s241 = smul.u32 64, %s18
        $region44: #{tpu_custom_call.1} parent=39 // pred_fallthru
          _
      $region40: #{tpu_custom_call.1} parent=5 // pred_fallthru
        _
      %p242 = scmp.le.s32.totalorder 1, %s18
      %p243 = scmp.lt.s32.totalorder %s18, 3
      %p244 = pnand %p242, %p243
      %p245 = pneg %p244
      // Predicated region
      $region45: #{tpu_custom_call.1} parent=5 // pred_check
        _
      $region46: #{tpu_custom_call.1} parent=5 // pred_check_branch
        %247 = sbr.rel (%p244) target = $region48
      $region47: #{tpu_custom_call.1} parent=5 // pred_region
        %s248 = ssub.s32 %s18, 1
        %s249 = smul.u32 64, %s23
        %p250 = scmp.lt.s32.totalorder %s249, 127
        %s251 = scalar_select %p250, %s249, 127
        %s252 = smul.addr %s251, 8
        %s253 = scalar_lea.vmem %s0, %s252
        %p254 = pneg %p44
        %p255 = pneg %p41
        %p256 = pneg %p65
        %p257 = pneg %p62
        %p258 = pneg %p86
        %p259 = pneg %p83
        %p260 = pneg %p107
        %p261 = pneg %p104
        %p262 = pneg %p128
        %p263 = pneg %p125
        %p264 = pneg %p149
        %p265 = pneg %p146
        %p266 = pneg %p170
        %p267 = pneg %p167
        %p268 = pneg %p196
        %p269 = pneg %p193
        %s270 = sand.u32 %s183, 1
        %s271 = scalar_lea.sflag [#allocation4], %s270
        %s272 = sand.u32 %s183, 1
        %s273 = smul.addr %s272, 4
        %s274 = scalar_lea.vmem [#allocation3], %s273
        %s275 = smul.u32 64, %s23
        %p276 = scmp.lt.s32.totalorder %s275, 127
        %s277 = scalar_select %p276, %s275, 127
        %s278 = smul.addr %s277, 8
        %s279 = scalar_lea.vmem %s0, %s278
        %s280 = smul.u32 64, %s23
        %s281 = smul.u32 4, %s23
        %v282 = vld [vmem:[%s279] sm:$0xff]
        %v283 = vld [vmem:[%s279 + $0x8] sm:$0xff]
        %v284 = vld [vmem:[%s279 + $0x10] sm:$0xff]
        %v285 = vld [vmem:[%s279 + $0x18] sm:$0xff]
        %v286 = vld [vmem:[%s279 + $0x20] sm:$0xff]
        %v287 = vld [vmem:[%s279 + $0x28] sm:$0xff]
        %v288 = vld [vmem:[%s279 + $0x30] sm:$0xff]
        %v289 = vld [vmem:[%s279 + $0x38] sm:$0xff]
        %v290 = vld [vmem:[%s279 + $0x40] sm:$0xff]
        %v291 = vld [vmem:[%s279 + $0x48] sm:$0xff]
        %v292 = vld [vmem:[%s279 + $0x50] sm:$0xff]
        %v293 = vld [vmem:[%s279 + $0x58] sm:$0xff]
        %v294 = vld [vmem:[%s279 + $0x60] sm:$0xff]
        %v295 = vld [vmem:[%s279 + $0x68] sm:$0xff]
        %v296 = vld [vmem:[%s279 + $0x70] sm:$0xff]
        %v297 = vld [vmem:[%s279 + $0x78] sm:$0xff]
        %v298 = vld [vmem:[%s279 + $0x80] sm:$0xff]
        %v299 = vld [vmem:[%s279 + $0x88] sm:$0xff]
        %v300 = vld [vmem:[%s279 + $0x90] sm:$0xff]
        %v301 = vld [vmem:[%s279 + $0x98] sm:$0xff]
        %v302 = vld [vmem:[%s279 + $0xa0] sm:$0xff]
        %v303 = vld [vmem:[%s279 + $0xa8] sm:$0xff]
        %v304 = vld [vmem:[%s279 + $0xb0] sm:$0xff]
        %v305 = vld [vmem:[%s279 + $0xb8] sm:$0xff]
        %v306 = vld [vmem:[%s279 + $0xc0] sm:$0xff]
        %v307 = vld [vmem:[%s279 + $0xc8] sm:$0xff]
        %v308 = vld [vmem:[%s279 + $0xd0] sm:$0xff]
        %v309 = vld [vmem:[%s279 + $0xd8] sm:$0xff]
        %v310 = vld [vmem:[%s279 + $0xe0] sm:$0xff]
        %v311 = vld [vmem:[%s279 + $0xe8] sm:$0xff]
        %v312 = vld [vmem:[%s279 + $0xf0] sm:$0xff]
        %v313 = vld [vmem:[%s279 + $0xf8] sm:$0xff]
        %v314 = vld [vmem:[%s279 + $0x100] sm:$0xff]
        %v315 = vld [vmem:[%s279 + $0x108] sm:$0xff]
        %v316 = vld [vmem:[%s279 + $0x110] sm:$0xff]
        %v317 = vld [vmem:[%s279 + $0x118] sm:$0xff]
        %v318 = vld [vmem:[%s279 + $0x120] sm:$0xff]
        %v319 = vld [vmem:[%s279 + $0x128] sm:$0xff]
        %v320 = vld [vmem:[%s279 + $0x130] sm:$0xff]
        %v321 = vld [vmem:[%s279 + $0x138] sm:$0xff]
        %v322 = vld [vmem:[%s279 + $0x140] sm:$0xff]
        %v323 = vld [vmem:[%s279 + $0x148] sm:$0xff]
        %v324 = vld [vmem:[%s279 + $0x150] sm:$0xff]
        %v325 = vld [vmem:[%s279 + $0x158] sm:$0xff]
        %v326 = vld [vmem:[%s279 + $0x160] sm:$0xff]
        %v327 = vld [vmem:[%s279 + $0x168] sm:$0xff]
        %v328 = vld [vmem:[%s279 + $0x170] sm:$0xff]
        %v329 = vld [vmem:[%s279 + $0x178] sm:$0xff]
        %v330 = vld [vmem:[%s279 + $0x180] sm:$0xff]
        %v331 = vld [vmem:[%s279 + $0x188] sm:$0xff]
        %v332 = vld [vmem:[%s279 + $0x190] sm:$0xff]
        %v333 = vld [vmem:[%s279 + $0x198] sm:$0xff]
        %v334 = vld [vmem:[%s279 + $0x1a0] sm:$0xff]
        %v335 = vld [vmem:[%s279 + $0x1a8] sm:$0xff]
        %v336 = vld [vmem:[%s279 + $0x1b0] sm:$0xff]
        %v337 = vld [vmem:[%s279 + $0x1b8] sm:$0xff]
        %v338 = vld [vmem:[%s279 + $0x1c0] sm:$0xff]
        %v339 = vld [vmem:[%s279 + $0x1c8] sm:$0xff]
        %v340 = vld [vmem:[%s279 + $0x1d0] sm:$0xff]
        %v341 = vld [vmem:[%s279 + $0x1d8] sm:$0xff]
        %v342 = vld [vmem:[%s279 + $0x1e0] sm:$0xff]
        %v343 = vld [vmem:[%s279 + $0x1e8] sm:$0xff]
        %v344 = vld [vmem:[%s279 + $0x1f0] sm:$0xff]
        %v345 = vld [vmem:[%s279 + $0x1f8] sm:$0xff]
        %v346 = vld [vmem:[%s1] sm:$0xff]
        %v347 = vld [vmem:[%s1 + $0x8] sm:$0xff]
        %v348 = vld [vmem:[%s1 + $0x10] sm:$0xff]
        %v349 = vld [vmem:[%s1 + $0x18] sm:$0xff]
        %v350 = vld [vmem:[%s2] sm:$0xff]
        %v351 = vld [vmem:[%s2 + $0x8] sm:$0xff]
        %v352 = vld [vmem:[%s2 + $0x10] sm:$0xff]
        %v353 = vld [vmem:[%s2 + $0x18] sm:$0xff]
        %355 = vset.pattern.permute.xlu0 0
        %356 = vperm.xlu0 %355, %v350
        %v357 = vpop.permute.xlu0 %356
        %360 = vset.pattern.permute.xlu0 0
        %361 = vperm.xlu0 %360, %v351
        %v362 = vpop.permute.xlu0 %361
        %365 = vset.pattern.permute.xlu0 0
        %366 = vperm.xlu0 %365, %v352
        %v367 = vpop.permute.xlu0 %366
        %370 = vset.pattern.permute.xlu0 0
        %371 = vperm.xlu0 %370, %v353
        %v372 = vpop.permute.xlu0 %371
        %vm374 = vcmask 261120
        %v376 = vsel %vm374, %v346, 0
        %v379 = vsel %vm374, %v347, 0
        %v382 = vsel %vm374, %v348, 0
        %v385 = vsel %vm374, %v349, 0
        %v388 = vsel %vm374, %v282, 0
        %v391 = vsel %vm374, %v283, 0
        %v394 = vsel %vm374, %v284, 0
        %v397 = vsel %vm374, %v285, 0
        %v400 = vsel %vm374, %v286, 0
        %v403 = vsel %vm374, %v287, 0
        %v406 = vsel %vm374, %v288, 0
        %v409 = vsel %vm374, %v289, 0
        %v412 = vsel %vm374, %v290, 0
        %v415 = vsel %vm374, %v291, 0
        %v418 = vsel %vm374, %v292, 0
        %v421 = vsel %vm374, %v293, 0
        %v424 = vsel %vm374, %v294, 0
        %v427 = vsel %vm374, %v295, 0
        %v430 = vsel %vm374, %v296, 0
        %v433 = vsel %vm374, %v297, 0
        %v436 = vsel %vm374, %v298, 0
        %v439 = vsel %vm374, %v299, 0
        %v442 = vsel %vm374, %v300, 0
        %v445 = vsel %vm374, %v301, 0
        %v448 = vsel %vm374, %v302, 0
        %v451 = vsel %vm374, %v303, 0
        %v454 = vsel %vm374, %v304, 0
        %v457 = vsel %vm374, %v305, 0
        %v460 = vsel %vm374, %v306, 0
        %v463 = vsel %vm374, %v307, 0
        %v466 = vsel %vm374, %v308, 0
        %v469 = vsel %vm374, %v309, 0
        %v472 = vsel %vm374, %v310, 0
        %v475 = vsel %vm374, %v311, 0
        %v478 = vsel %vm374, %v312, 0
        %v481 = vsel %vm374, %v313, 0
        %v484 = vsel %vm374, %v314, 0
        %v487 = vsel %vm374, %v315, 0
        %v490 = vsel %vm374, %v316, 0
        %v493 = vsel %vm374, %v317, 0
        %v496 = vsel %vm374, %v318, 0
        %v499 = vsel %vm374, %v319, 0
        %v502 = vsel %vm374, %v320, 0
        %v505 = vsel %vm374, %v321, 0
        %v508 = vsel %vm374, %v322, 0
        %v511 = vsel %vm374, %v323, 0
        %v514 = vsel %vm374, %v324, 0
        %v517 = vsel %vm374, %v325, 0
        %v520 = vsel %vm374, %v326, 0
        %v523 = vsel %vm374, %v327, 0
        %v526 = vsel %vm374, %v328, 0
        %v529 = vsel %vm374, %v329, 0
        %v532 = vsel %vm374, %v330, 0
        %v535 = vsel %vm374, %v331, 0
        %v538 = vsel %vm374, %v332, 0
        %v541 = vsel %vm374, %v333, 0
        %v544 = vsel %vm374, %v334, 0
        %v547 = vsel %vm374, %v335, 0
        %v550 = vsel %vm374, %v336, 0
        %v553 = vsel %vm374, %v337, 0
        %v556 = vsel %vm374, %v338, 0
        %v559 = vsel %vm374, %v339, 0
        %v562 = vsel %vm374, %v340, 0
        %v565 = vsel %vm374, %v341, 0
        %v568 = vsel %vm374, %v342, 0
        %v571 = vsel %vm374, %v343, 0
        %v574 = vsel %vm374, %v344, 0
        %v577 = vsel %vm374, %v345, 0
        %579 = vmatprep.subr.mxu0 0.0
        %580 = vmatpush1.xpose.msra.mxu0 %v388
        %581 = vmatprep.subr.mxu0 0.0
        %582 = vmatpush1.xpose.msra.mxu0 %v391
        %583 = vmatprep.subr.mxu0 0.0
        %584 = vmatpush1.xpose.msra.mxu0 %v394
        %585 = vmatprep.subr.mxu0 0.0
        %586 = vmatpush1.xpose.msra.mxu0 %v397
        %587 = vmatprep.subr.mxu0 0.0
        %588 = vmatpush1.xpose.msra.mxu0 %v400
        %589 = vmatprep.subr.mxu0 0.0
        %590 = vmatpush1.xpose.msra.mxu0 %v403
        %591 = vmatprep.subr.mxu0 0.0
        %592 = vmatpush1.xpose.msra.mxu0 %v406
        %593 = vmatprep.subr.mxu0 0.0
        %594 = vmatpush1.xpose.msra.mxu0 %v409
        %595 = vmatprep.subr.mxu0 0.0
        %596 = vmatpush1.xpose.msra.mxu0 %v412
        %597 = vmatprep.subr.mxu0 0.0
        %598 = vmatpush1.xpose.msra.mxu0 %v415
        %599 = vmatprep.subr.mxu0 0.0
        %600 = vmatpush1.xpose.msra.mxu0 %v418
        %601 = vmatprep.subr.mxu0 0.0
        %602 = vmatpush1.xpose.msra.mxu0 %v421
        %603 = vmatprep.subr.mxu0 0.0
        %604 = vmatpush1.xpose.msra.mxu0 %v424
        %605 = vmatprep.subr.mxu0 0.0
        %606 = vmatpush1.xpose.msra.mxu0 %v427
        %607 = vmatprep.subr.mxu0 0.0
        %608 = vmatpush1.xpose.msra.mxu0 %v430
        %609 = vmatprep.subr.mxu0 0.0
        %610 = vmatpush1.xpose.msra.mxu0 %v433
        %611 = vmatprep.subr.mxu0 0.0
        %612 = vmatpush1.xpose.msra.mxu0 %v436
        %613 = vmatprep.subr.mxu0 0.0
        %614 = vmatpush1.xpose.msra.mxu0 %v439
        %615 = vmatprep.subr.mxu0 0.0
        %616 = vmatpush1.xpose.msra.mxu0 %v442
        %617 = vmatprep.subr.mxu0 0.0
        %618 = vmatpush1.xpose.msra.mxu0 %v445
        %619 = vmatprep.subr.mxu0 0.0
        %620 = vmatpush1.xpose.msra.mxu0 %v448
        %621 = vmatprep.subr.mxu0 0.0
        %622 = vmatpush1.xpose.msra.mxu0 %v451
        %623 = vmatprep.subr.mxu0 0.0
        %624 = vmatpush1.xpose.msra.mxu0 %v454
        %625 = vmatprep.subr.mxu0 0.0
        %626 = vmatpush1.xpose.msra.mxu0 %v457
        %627 = vmatprep.subr.mxu0 0.0
        %628 = vmatpush1.xpose.msra.mxu0 %v460
        %629 = vmatprep.subr.mxu0 0.0
        %630 = vmatpush1.xpose.msra.mxu0 %v463
        %631 = vmatprep.subr.mxu0 0.0
        %632 = vmatpush1.xpose.msra.mxu0 %v466
        %633 = vmatprep.subr.mxu0 0.0
        %634 = vmatpush1.xpose.msra.mxu0 %v469
        %635 = vmatprep.subr.mxu0 0.0
        %636 = vmatpush1.xpose.msra.mxu0 %v472
        %637 = vmatprep.subr.mxu0 0.0
        %638 = vmatpush1.xpose.msra.mxu0 %v475
        %639 = vmatprep.subr.mxu0 0.0
        %640 = vmatpush1.xpose.msra.mxu0 %v478
        %641 = vmatprep.subr.mxu0 0.0
        %642 = vmatpush1.xpose.msra.mxu0 %v481
        %643 = vmatprep.mubr.f32.mxu0 0.0
        %644 = vmatmul.mubr.f32.gmra.mrb[0].mxu0 %v376
        %v645 = vpop.f32.mrb[0].mxu0
        %v646 = vadd.f32 %v357, %v645
        %v647 = vpop.f32.mrb[0].mxu0
        %v648 = vadd.f32 %v357, %v647
        %649 = vmatprep.mubr.f32.mxu0 0.0
        %650 = vmatmul.mubr.f32.gmra.mrb[0].mxu0 %v379
        %v651 = vpop.f32.mrb[0].mxu0
        %v652 = vadd.f32 %v362, %v651
        %v653 = vpop.f32.mrb[0].mxu0
        %v654 = vadd.f32 %v362, %v653
        %655 = vmatprep.mubr.f32.mxu0 0.0
        %656 = vmatmul.mubr.f32.gmra.mrb[0].mxu0 %v382
        %v657 = vpop.f32.mrb[0].mxu0
        %v658 = vadd.f32 %v367, %v657
        %v659 = vpop.f32.mrb[0].mxu0
        %v660 = vadd.f32 %v367, %v659
        %661 = vmatprep.mubr.f32.mxu0 0.0
        %662 = vmatmul.mubr.f32.gmra.mrb[0].mxu0 %v385
        %v663 = vpop.f32.mrb[0].mxu0
        %v664 = vadd.f32 %v372, %v663
        %v665 = vpop.f32.mrb[0].mxu0
        %v666 = vadd.f32 %v372, %v665
        %667 = vdwg.mxu0
        %668 = vmatprep.subr.mxu0 0.0
        %669 = vmatpush1.xpose.msra.mxu0 %v484
        %670 = vmatprep.subr.mxu0 0.0
        %671 = vmatpush1.xpose.msra.mxu0 %v487
        %672 = vmatprep.subr.mxu0 0.0
        %673 = vmatpush1.xpose.msra.mxu0 %v490
        %674 = vmatprep.subr.mxu0 0.0
        %675 = vmatpush1.xpose.msra.mxu0 %v493
        %676 = vmatprep.subr.mxu0 0.0
        %677 = vmatpush1.xpose.msra.mxu0 %v496
        %678 = vmatprep.subr.mxu0 0.0
        %679 = vmatpush1.xpose.msra.mxu0 %v499
        %680 = vmatprep.subr.mxu0 0.0
        %681 = vmatpush1.xpose.msra.mxu0 %v502
        %682 = vmatprep.subr.mxu0 0.0
        %683 = vmatpush1.xpose.msra.mxu0 %v505
        %684 = vmatprep.subr.mxu0 0.0
        %685 = vmatpush1.xpose.msra.mxu0 %v508
        %686 = vmatprep.subr.mxu0 0.0
        %687 = vmatpush1.xpose.msra.mxu0 %v511
        %688 = vmatprep.subr.mxu0 0.0
        %689 = vmatpush1.xpose.msra.mxu0 %v514
        %690 = vmatprep.subr.mxu0 0.0
        %691 = vmatpush1.xpose.msra.mxu0 %v517
        %692 = vmatprep.subr.mxu0 0.0
        %693 = vmatpush1.xpose.msra.mxu0 %v520
        %694 = vmatprep.subr.mxu0 0.0
        %695 = vmatpush1.xpose.msra.mxu0 %v523
        %696 = vmatprep.subr.mxu0 0.0
        %697 = vmatpush1.xpose.msra.mxu0 %v526
        %698 = vmatprep.subr.mxu0 0.0
        %699 = vmatpush1.xpose.msra.mxu0 %v529
        %700 = vmatprep.subr.mxu0 0.0
        %701 = vmatpush1.xpose.msra.mxu0 %v532
        %702 = vmatprep.subr.mxu0 0.0
        %703 = vmatpush1.xpose.msra.mxu0 %v535
        %704 = vmatprep.subr.mxu0 0.0
        %705 = vmatpush1.xpose.msra.mxu0 %v538
        %706 = vmatprep.subr.mxu0 0.0
        %707 = vmatpush1.xpose.msra.mxu0 %v541
        %708 = vmatprep.subr.mxu0 0.0
        %709 = vmatpush1.xpose.msra.mxu0 %v544
        %710 = vmatprep.subr.mxu0 0.0
        %711 = vmatpush1.xpose.msra.mxu0 %v547
        %712 = vmatprep.subr.mxu0 0.0
        %713 = vmatpush1.xpose.msra.mxu0 %v550
        %714 = vmatprep.subr.mxu0 0.0
        %715 = vmatpush1.xpose.msra.mxu0 %v553
        %716 = vmatprep.subr.mxu0 0.0
        %717 = vmatpush1.xpose.msra.mxu0 %v556
        %718 = vmatprep.subr.mxu0 0.0
        %719 = vmatpush1.xpose.msra.mxu0 %v559
        %720 = vmatprep.subr.mxu0 0.0
        %721 = vmatpush1.xpose.msra.mxu0 %v562
        %722 = vmatprep.subr.mxu0 0.0
        %723 = vmatpush1.xpose.msra.mxu0 %v565
        %724 = vmatprep.subr.mxu0 0.0
        %725 = vmatpush1.xpose.msra.mxu0 %v568
        %726 = vmatprep.subr.mxu0 0.0
        %727 = vmatpush1.xpose.msra.mxu0 %v571
        %728 = vmatprep.subr.mxu0 0.0
        %729 = vmatpush1.xpose.msra.mxu0 %v574
        %730 = vmatprep.subr.mxu0 0.0
        %731 = vmatpush1.xpose.msra.mxu0 %v577
        %732 = vmatprep.mubr.f32.mxu0 0.0
        %733 = vmatmul.mubr.f32.gmra.mrb[0].mxu0 %v376
        %v734 = vpop.f32.mrb[0].mxu0
        %v735 = vadd.f32 %v357, %v734
        %v736 = vpop.f32.mrb[0].mxu0
        %v737 = vadd.f32 %v357, %v736
        %738 = vmatprep.mubr.f32.mxu0 0.0
        %739 = vmatmul.mubr.f32.gmra.mrb[0].mxu0 %v379
        %v740 = vpop.f32.mrb[0].mxu0
        %v741 = vadd.f32 %v362, %v740
        %v742 = vpop.f32.mrb[0].mxu0
        %v743 = vadd.f32 %v362, %v742
        %744 = vmatprep.mubr.f32.mxu0 0.0
        %745 = vmatmul.mubr.f32.gmra.mrb[0].mxu0 %v382
        %v746 = vpop.f32.mrb[0].mxu0
        %v747 = vadd.f32 %v367, %v746
        %v748 = vpop.f32.mrb[0].mxu0
        %v749 = vadd.f32 %v367, %v748
        %750 = vmatprep.mubr.f32.mxu0 0.0
        %751 = vmatmul.mubr.f32.gmra.mrb[0].mxu0 %v385
        %v752 = vpop.f32.mrb[0].mxu0
        %v753 = vadd.f32 %v372, %v752
        %v754 = vpop.f32.mrb[0].mxu0
        %v755 = vadd.f32 %v372, %v754
        %756 = vdwg.mxu0
        %v757 = vmax.f32 %v646, 0.0
        %v758 = vmax.f32 %v648, 0.0
        %v759 = vmax.f32 %v735, 0.0
        %v760 = vmax.f32 %v737, 0.0
        %v761 = vmax.f32 %v652, 0.0
        %v762 = vmax.f32 %v654, 0.0
        %v763 = vmax.f32 %v741, 0.0
        %v764 = vmax.f32 %v743, 0.0
        %v765 = vmax.f32 %v658, 0.0
        %v766 = vmax.f32 %v660, 0.0
        %v767 = vmax.f32 %v747, 0.0
        %v768 = vmax.f32 %v749, 0.0
        %v769 = vmax.f32 %v664, 0.0
        %v770 = vmax.f32 %v666, 0.0
        %v771 = vmax.f32 %v753, 0.0
        %v772 = vmax.f32 %v755, 0.0
        %v773 = vld [vmem:[%s3] sm:$0xff]
        %v774 = vld [vmem:[%s3 + $0x8] sm:$0xff]
        %v775 = vld [vmem:[%s3 + $0x10] sm:$0xff]
        %v776 = vld [vmem:[%s3 + $0x18] sm:$0xff]
        %v777 = vld [vmem:[%s4] sm:$0xff]
        %v778 = vld [vmem:[%s4 + $0x8] sm:$0xff]
        %v779 = vld [vmem:[%s4 + $0x10] sm:$0xff]
        %v780 = vld [vmem:[%s4 + $0x18] sm:$0xff]
        %782 = vset.pattern.permute.xlu0 0
        %783 = vperm.xlu0 %782, %v777
        %v784 = vpop.permute.xlu0 %783
        %787 = vset.pattern.permute.xlu0 0
        %788 = vperm.xlu0 %787, %v778
        %v789 = vpop.permute.xlu0 %788
        %792 = vset.pattern.permute.xlu0 0
        %793 = vperm.xlu0 %792, %v779
        %v794 = vpop.permute.xlu0 %793
        %797 = vset.pattern.permute.xlu0 0
        %798 = vperm.xlu0 %797, %v780
        %v799 = vpop.permute.xlu0 %798
        %v802 = vsel %vm374, %v773, 0
        %v805 = vsel %vm374, %v774, 0
        %v808 = vsel %vm374, %v775, 0
        %v811 = vsel %vm374, %v776, 0
        %813 = vmatprep.subr.mxu0 %v758
        %814 = vmatpush1.msra.mxu0 %v757
        %815 = vmatprep.subr.mxu0 %v762
        %816 = vmatpush1.msra.mxu0 %v761
        %817 = vmatprep.subr.mxu0 %v766
        %818 = vmatpush1.msra.mxu0 %v765
        %819 = vmatprep.subr.mxu0 %v770
        %820 = vmatpush1.msra.mxu0 %v769
        %821 = vmatprep.subr.mxu0 0.0
        %822 = vmatpush1.msra.mxu0 0.0
        %823 = vmatprep.subr.mxu0 0.0
        %824 = vmatpush1.msra.mxu0 0.0
        %825 = vmatprep.subr.mxu0 0.0
        %826 = vmatpush1.msra.mxu0 0.0
        %827 = vmatprep.subr.mxu0 0.0
        %828 = vmatpush1.msra.mxu0 0.0
        %829 = vmatprep.subr.mxu0 0.0
        %830 = vmatpush1.msra.mxu0 0.0
        %831 = vmatprep.subr.mxu0 0.0
        %832 = vmatpush1.msra.mxu0 0.0
        %833 = vmatprep.subr.mxu0 0.0
        %834 = vmatpush1.msra.mxu0 0.0
        %835 = vmatprep.subr.mxu0 0.0
        %836 = vmatpush1.msra.mxu0 0.0
        %837 = vmatprep.subr.mxu0 0.0
        %838 = vmatpush1.msra.mxu0 0.0
        %839 = vmatprep.subr.mxu0 0.0
        %840 = vmatpush1.msra.mxu0 0.0
        %841 = vmatprep.subr.mxu0 0.0
        %842 = vmatpush1.msra.mxu0 0.0
        %843 = vmatprep.subr.mxu0 0.0
        %844 = vmatpush1.msra.mxu0 0.0
        %845 = vmatprep.subr.mxu0 0.0
        %846 = vmatpush1.msra.mxu0 0.0
        %847 = vmatprep.subr.mxu0 0.0
        %848 = vmatpush1.msra.mxu0 0.0
        %849 = vmatprep.subr.mxu0 0.0
        %850 = vmatpush1.msra.mxu0 0.0
        %851 = vmatprep.subr.mxu0 0.0
        %852 = vmatpush1.msra.mxu0 0.0
        %853 = vmatprep.subr.mxu0 0.0
        %854 = vmatpush1.msra.mxu0 0.0
        %855 = vmatprep.subr.mxu0 0.0
        %856 = vmatpush1.msra.mxu0 0.0
        %857 = vmatprep.subr.mxu0 0.0
        %858 = vmatpush1.msra.mxu0 0.0
        %859 = vmatprep.subr.mxu0 0.0
        %860 = vmatpush1.msra.mxu0 0.0
        %861 = vmatprep.subr.mxu0 0.0
        %862 = vmatpush1.msra.mxu0 0.0
        %863 = vmatprep.subr.mxu0 0.0
        %864 = vmatpush1.msra.mxu0 0.0
        %865 = vmatprep.subr.mxu0 0.0
        %866 = vmatpush1.msra.mxu0 0.0
        %867 = vmatprep.subr.mxu0 0.0
        %868 = vmatpush1.msra.mxu0 0.0
        %869 = vmatprep.subr.mxu0 0.0
        %870 = vmatpush1.msra.mxu0 0.0
        %871 = vmatprep.subr.mxu0 0.0
        %872 = vmatpush1.msra.mxu0 0.0
        %873 = vmatprep.subr.mxu0 0.0
        %874 = vmatpush1.msra.mxu0 0.0
        %875 = vmatprep.subr.mxu0 0.0
        %876 = vmatpush1.msra.mxu0 0.0
        %877 = vmatprep.mubr.f32.mxu0 0.0
        %878 = vmatmul.mubr.f32.gmra.mrb[0].mxu0 %v802
        %v879 = vpop.f32.mrb[0].mxu0
        %v880 = vadd.f32 %v784, %v879
        %v881 = vpop.f32.mrb[0].mxu0
        %v882 = vadd.f32 %v784, %v881
        %883 = vmatprep.mubr.f32.mxu0 0.0
        %884 = vmatmul.mubr.f32.gmra.mrb[0].mxu0 %v805
        %v885 = vpop.f32.mrb[0].mxu0
        %v886 = vadd.f32 %v789, %v885
        %v887 = vpop.f32.mrb[0].mxu0
        %v888 = vadd.f32 %v789, %v887
        %889 = vmatprep.mubr.f32.mxu0 0.0
        %890 = vmatmul.mubr.f32.gmra.mrb[0].mxu0 %v808
        %v891 = vpop.f32.mrb[0].mxu0
        %v892 = vadd.f32 %v794, %v891
        %v893 = vpop.f32.mrb[0].mxu0
        %v894 = vadd.f32 %v794, %v893
        %895 = vmatprep.mubr.f32.mxu0 0.0
        %896 = vmatmul.mubr.f32.gmra.mrb[0].mxu0 %v811
        %v897 = vpop.f32.mrb[0].mxu0
        %v898 = vadd.f32 %v799, %v897
        %v899 = vpop.f32.mrb[0].mxu0
        %v900 = vadd.f32 %v799, %v899
        %901 = vdwg.mxu0
        %902 = vmatprep.subr.mxu0 %v760
        %903 = vmatpush1.msra.mxu0 %v759
        %904 = vmatprep.subr.mxu0 %v764
        %905 = vmatpush1.msra.mxu0 %v763
        %906 = vmatprep.subr.mxu0 %v768
        %907 = vmatpush1.msra.mxu0 %v767
        %908 = vmatprep.subr.mxu0 %v772
        %909 = vmatpush1.msra.mxu0 %v771
        %910 = vmatprep.subr.mxu0 0.0
        %911 = vmatpush1.msra.mxu0 0.0
        %912 = vmatprep.subr.mxu0 0.0
        %913 = vmatpush1.msra.mxu0 0.0
        %914 = vmatprep.subr.mxu0 0.0
        %915 = vmatpush1.msra.mxu0 0.0
        %916 = vmatprep.subr.mxu0 0.0
        %917 = vmatpush1.msra.mxu0 0.0
        %918 = vmatprep.subr.mxu0 0.0
        %919 = vmatpush1.msra.mxu0 0.0
        %920 = vmatprep.subr.mxu0 0.0
        %921 = vmatpush1.msra.mxu0 0.0
        %922 = vmatprep.subr.mxu0 0.0
        %923 = vmatpush1.msra.mxu0 0.0
        %924 = vmatprep.subr.mxu0 0.0
        %925 = vmatpush1.msra.mxu0 0.0
        %926 = vmatprep.subr.mxu0 0.0
        %927 = vmatpush1.msra.mxu0 0.0
        %928 = vmatprep.subr.mxu0 0.0
        %929 = vmatpush1.msra.mxu0 0.0
        %930 = vmatprep.subr.mxu0 0.0
        %931 = vmatpush1.msra.mxu0 0.0
        %932 = vmatprep.subr.mxu0 0.0
        %933 = vmatpush1.msra.mxu0 0.0
        %934 = vmatprep.subr.mxu0 0.0
        %935 = vmatpush1.msra.mxu0 0.0
        %936 = vmatprep.subr.mxu0 0.0
        %937 = vmatpush1.msra.mxu0 0.0
        %938 = vmatprep.subr.mxu0 0.0
        %939 = vmatpush1.msra.mxu0 0.0
        %940 = vmatprep.subr.mxu0 0.0
        %941 = vmatpush1.msra.mxu0 0.0
        %942 = vmatprep.subr.mxu0 0.0
        %943 = vmatpush1.msra.mxu0 0.0
        %944 = vmatprep.subr.mxu0 0.0
        %945 = vmatpush1.msra.mxu0 0.0
        %946 = vmatprep.subr.mxu0 0.0
        %947 = vmatpush1.msra.mxu0 0.0
        %948 = vmatprep.subr.mxu0 0.0
        %949 = vmatpush1.msra.mxu0 0.0
        %950 = vmatprep.subr.mxu0 0.0
        %951 = vmatpush1.msra.mxu0 0.0
        %952 = vmatprep.subr.mxu0 0.0
        %953 = vmatpush1.msra.mxu0 0.0
        %954 = vmatprep.subr.mxu0 0.0
        %955 = vmatpush1.msra.mxu0 0.0
        %956 = vmatprep.subr.mxu0 0.0
        %957 = vmatpush1.msra.mxu0 0.0
        %958 = vmatprep.subr.mxu0 0.0
        %959 = vmatpush1.msra.mxu0 0.0
        %960 = vmatprep.subr.mxu0 0.0
        %961 = vmatpush1.msra.mxu0 0.0
        %962 = vmatprep.subr.mxu0 0.0
        %963 = vmatpush1.msra.mxu0 0.0
        %964 = vmatprep.subr.mxu0 0.0
        %965 = vmatpush1.msra.mxu0 0.0
        %966 = vmatprep.mubr.f32.mxu0 0.0
        %967 = vmatmul.mubr.f32.gmra.mrb[0].mxu0 %v802
        %v968 = vpop.f32.mrb[0].mxu0
        %v969 = vadd.f32 %v784, %v968
        %v970 = vpop.f32.mrb[0].mxu0
        %v971 = vadd.f32 %v784, %v970
        %972 = vmatprep.mubr.f32.mxu0 0.0
        %973 = vmatmul.mubr.f32.gmra.mrb[0].mxu0 %v805
        %v974 = vpop.f32.mrb[0].mxu0
        %v975 = vadd.f32 %v789, %v974
        %v976 = vpop.f32.mrb[0].mxu0
        %v977 = vadd.f32 %v789, %v976
        %978 = vmatprep.mubr.f32.mxu0 0.0
        %979 = vmatmul.mubr.f32.gmra.mrb[0].mxu0 %v808
        %v980 = vpop.f32.mrb[0].mxu0
        %v981 = vadd.f32 %v794, %v980
        %v982 = vpop.f32.mrb[0].mxu0
        %v983 = vadd.f32 %v794, %v982
        %984 = vmatprep.mubr.f32.mxu0 0.0
        %985 = vmatmul.mubr.f32.gmra.mrb[0].mxu0 %v811
        %v986 = vpop.f32.mrb[0].mxu0
        %v987 = vadd.f32 %v799, %v986
        %v988 = vpop.f32.mrb[0].mxu0
        %v989 = vadd.f32 %v799, %v988
        %990 = vdwg.mxu0
        %v991 = vmax.f32 %v880, 0.0
        %v992 = vmax.f32 %v882, 0.0
        %v993 = vmax.f32 %v969, 0.0
        %v994 = vmax.f32 %v971, 0.0
        %v995 = vmax.f32 %v886, 0.0
        %v996 = vmax.f32 %v888, 0.0
        %v997 = vmax.f32 %v975, 0.0
        %v998 = vmax.f32 %v977, 0.0
        %v999 = vmax.f32 %v892, 0.0
        %v1000 = vmax.f32 %v894, 0.0
        %v1001 = vmax.f32 %v981, 0.0
        %v1002 = vmax.f32 %v983, 0.0
        %v1003 = vmax.f32 %v898, 0.0
        %v1004 = vmax.f32 %v900, 0.0
        %v1005 = vmax.f32 %v987, 0.0
        %v1006 = vmax.f32 %v989, 0.0
        %v1007 = vld [vmem:[%s5] sm:$0xff]
        %v1008 = vld [vmem:[%s5 + $0x8] sm:$0xff]
        %v1009 = vld [vmem:[%s5 + $0x10] sm:$0xff]
        %v1010 = vld [vmem:[%s5 + $0x18] sm:$0xff]
        %v1011 = vld [vmem:[#allocation2] sm:$0x1]
        %1013 = vset.pattern.permute.xlu0 0
        %1014 = vperm.xlu0 %1013, %v1007
        %v1015 = vpop.permute.xlu0 %1014
        %1018 = vset.pattern.permute.xlu0 0
        %1019 = vperm.xlu0 %1018, %v1008
        %v1020 = vpop.permute.xlu0 %1019
        %1023 = vset.pattern.permute.xlu0 0
        %1024 = vperm.xlu0 %1023, %v1009
        %v1025 = vpop.permute.xlu0 %1024
        %1028 = vset.pattern.permute.xlu0 0
        %1029 = vperm.xlu0 %1028, %v1010
        %v1030 = vpop.permute.xlu0 %1029
        %v1032 = vmul.f32 %v991, %v1015
        %v1033 = vmul.f32 %v992, %v1015
        %v1034 = vmul.f32 %v993, %v1015
        %v1035 = vmul.f32 %v994, %v1015
        %v1036 = vmul.f32 %v995, %v1020
        %v1037 = vmul.f32 %v996, %v1020
        %v1038 = vmul.f32 %v997, %v1020
        %v1039 = vmul.f32 %v998, %v1020
        %v1040 = vmul.f32 %v999, %v1025
        %v1041 = vmul.f32 %v1000, %v1025
        %v1042 = vmul.f32 %v1001, %v1025
        %v1043 = vmul.f32 %v1002, %v1025
        %v1044 = vmul.f32 %v1003, %v1030
        %v1045 = vmul.f32 %v1004, %v1030
        %v1046 = vmul.f32 %v1005, %v1030
        %v1047 = vmul.f32 %v1006, %v1030
        %v1048 = vadd.f32 %v1032, %v1036
        %v1049 = vadd.f32 %v1048, %v1040
        %v1050 = vadd.f32 %v1049, %v1044
        %v1051 = vrot.slane %v1050, 4
        %v1052 = vadd.f32 %v1050, %v1051
        %v1053 = vrot.slane %v1052, 2
        %v1054 = vadd.f32 %v1052, %v1053
        %v1055 = vrot.slane %v1054, 1
        %v1056 = vadd.f32 %v1054, %v1055
        %v1057 = vadd.f32 %v1033, %v1037
        %v1058 = vadd.f32 %v1057, %v1041
        %v1059 = vadd.f32 %v1058, %v1045
        %v1060 = vrot.slane %v1059, 4
        %v1061 = vadd.f32 %v1059, %v1060
        %v1062 = vrot.slane %v1061, 2
        %v1063 = vadd.f32 %v1061, %v1062
        %v1064 = vrot.slane %v1063, 1
        %v1065 = vadd.f32 %v1063, %v1064
        %v1066 = vadd.f32 %v1034, %v1038
        %v1067 = vadd.f32 %v1066, %v1042
        %v1068 = vadd.f32 %v1067, %v1046
        %v1069 = vrot.slane %v1068, 4
        %v1070 = vadd.f32 %v1068, %v1069
        %v1071 = vrot.slane %v1070, 2
        %v1072 = vadd.f32 %v1070, %v1071
        %v1073 = vrot.slane %v1072, 1
        %v1074 = vadd.f32 %v1072, %v1073
        %v1075 = vadd.f32 %v1035, %v1039
        %v1076 = vadd.f32 %v1075, %v1043
        %v1077 = vadd.f32 %v1076, %v1047
        %v1078 = vrot.slane %v1077, 4
        %v1079 = vadd.f32 %v1077, %v1078
        %v1080 = vrot.slane %v1079, 2
        %v1081 = vadd.f32 %v1079, %v1080
        %v1082 = vrot.slane %v1081, 1
        %v1083 = vadd.f32 %v1081, %v1082
        %1085 = vset.pattern.permute.xlu0 0
        %1086 = vperm.xlu0 %1085, %v1011
        %v1087 = vpop.permute.xlu0 %1086
        %v1089 = vlaneseq
        %v1090 = vshrl.u32 %v1089, 7
        %v1091 = vsub.s32 0, %v1090
        %v1092 = vrot.slane %v1087, %v1091
        %v1093 = vadd.f32 %v1056, %v1092
        %v1094 = vadd.f32 %v1065, %v1092
        %v1095 = vadd.f32 %v1074, %v1092
        %v1096 = vadd.f32 %v1083, %v1092
        %v1101 = vcombine.low %v1093, %v1094
        %v1102 = vcombine.low %v1095, %v1096
        %v1104 = vunpack.c.l.s4 1966171168
        %v1105 = vunpack.c.0.s8 %v1104
        %v1106 = vlaneseq
        %v1107 = vshrl.u32 %v1106, 7
        %v1108 = vsub.s32 %v1105, %v1107
        %v1109 = vrot.slane %v1101, %v1108
        %v1111 = vunpack.c.l.s4 1966171168
        %v1112 = vunpack.c.0.s8 %v1111
        %v1113 = vlaneseq
        %v1114 = vshrl.u32 %v1113, 7
        %v1115 = vsub.s32 %v1112, %v1114
        %v1116 = vrot.slane %v1102, %v1115
        %v1117 = vcombine.low %v1109, %v1116
        %v1119 = vunpack.c.l.s4 1966171168
        %v1120 = vunpack.c.0.s8 %v1119
        %v1121 = vlaneseq
        %v1122 = vshrl.u32 %v1121, 7
        %v1123 = vsub.s32 %v1120, %v1122
        %v1124 = vrot.slane %v1117, %v1123
        %v1126 = vlaneseq
        %vm1127 = vcmp.ge.s32.totalorder %v1126, 0
        %vm1128 = vcmp.lt.s32.totalorder %v1126, 512
        %vm1129 = vmand %vm1127, %vm1128
        %1130 = vst.msk [vmem:[%s274] sm:$0xf] %vm1129, %v1124
        %s1131 = sand.u32 %s183, 1
        %s1132 = scalar_lea.sflag [#allocation4], %s1131
        %s1133 = sand.u32 %s183, 1
        %s1134 = smul.addr %s1133, 4
        %s1135 = scalar_lea.vmem [#allocation3], %s1134
        // Predicated region
        $region49: #{tpu_custom_call.1} parent=47 // pred_check
          %p1136 = pneg %p193
        $region50: #{tpu_custom_call.1} parent=47 // pred_check_branch
          %1138 = sbr.rel (%p1136) target = $region52
        $region51: #{tpu_custom_call.1} parent=47 // pred_region
          %s1139 = smul.u32 4, %s23
          %s1141 = ssub.s32 64, 64
          %1142 = vsyncadd %s1132, %s1141
          %s1143 = smul.addr %s1139, 16
          %s1144 = scalar_lea.hbm %s7, %s1143
          %s1146 = sshll.u32 %s1135, 4
          %s1147 = int_to_ptr.vmem [resolvable:$true] %s1146
          %1149 = dma.vmem_to_hbm [thread:$0]  %s1147, 64, %s1144, %s1132
        $region52: #{tpu_custom_call.1} parent=47 // pred_fallthru
          _
      $region48: #{tpu_custom_call.1} parent=5 // pred_fallthru
        _
      %p1150 = scmp.le.s32.totalorder 2, %s18
      // Predicated region
      $region53: #{tpu_custom_call.1} parent=5 // pred_check
        %p1151 = pneg %p1150
      $region54: #{tpu_custom_call.1} parent=5 // pred_check_branch
        %1153 = sbr.rel (%p1151) target = $region56
      $region55: #{tpu_custom_call.1} parent=5 // pred_region
        %s1154 = ssub.s32 %s18, 2
        // Predicated region
        $region57: #{tpu_custom_call.1} parent=55 // pred_check
          %p1155 = pneg %p199
        $region58: #{tpu_custom_call.1} parent=55 // pred_check_branch
          %1157 = sbr.rel (%p1155) target = $region60
        $region59: #{tpu_custom_call.1} parent=55 // pred_region
          %s1158 = sand.u32 %s184, 1
          %s1159 = scalar_lea.sflag [#allocation4], %s1158
          %s1160 = sand.u32 %s184, 1
          %s1161 = smul.addr %s1160, 4
          %s1162 = scalar_lea.vmem [#allocation3], %s1161
          %1163 = dma.done %s1159, 64
        $region60: #{tpu_custom_call.1} parent=55 // pred_fallthru
          _
      $region56: #{tpu_custom_call.1} parent=5 // pred_fallthru
        _
    $region6: #{tpu_custom_call.1} parent=1 // loop_footer
      %s22 = sadd.s32 1, %s18
    $region7: #{tpu_custom_call.1} parent=1 // loop_footer_branch
      %17 = sbr.rel target = $region3
    $region8: #{tpu_custom_call.1} parent=1 // loop_exit
      _
    %1164 = vsyncpa [#allocation4], 1
    %s1165 = scalar_lea.sflag [#allocation4], 1
    %1166 = vsyncpa %s1165, 1

</llo_original>
